<compile_context>
chip_gen: v7x
topology: tpu7x:2x2x1
jax: 0.10.0
libtpu: 0.0.40
codegen_flags: <defaults>
</compile_context>

<pallas_src>
import jax
import jax.numpy as jnp
import numpy as np
from jax import lax
from jax.experimental import pallas as pl
from jax.experimental.pallas import tpu as pltpu


def _make_fused_kernel(N, L, K, chans):
    """Build the fused kernel body for a ConvLayers stack.

    Activation layout (VMEM scratch, shape (C_max, N*Lp + 2*pad), f32):
      sample n occupies lane columns [pad + n*Lp, pad + (n+1)*Lp) where
      Lp = L + 2*pad and each sample carries its own zero padding at both
      ends; an extra pad-wide zero halo sits at the outer edges so every conv
      tap k reads the uniform lane window [k, k + N*Lp).
    """
    pad = K // 2
    Lp = L + 2 * pad
    NLp = N * Lp
    n_layers = len(chans) - 1
    eps = 1e-5
    inv_cnt = 1.0 / float(N * L)

    def kernel(*refs):
        x_ref = refs[0]                              # (N, C_in0, L)
        layer_refs = refs[1:1 + 3 * n_layers]        # (w, gamma, beta) per layer
        o_ref = refs[1 + 3 * n_layers]               # (N, C_last, L)
        act_s = refs[2 + 3 * n_layers]               # VMEM (C_max, NLp + 2*pad)

        # Zero once: provides all conv same-padding zeros for every layer.
        act_s[...] = jnp.zeros(act_s.shape, jnp.float32)

        # Scatter the input batch into the lane-dense padded-flat layout.
        c0 = chans[0]
        for n in range(N):
            start = pad + n * Lp + pad
            act_s[0:c0, start:start + L] = x_ref[n]

        # Interior-column mask over the NLp-wide activation (hoisted out of
        # the layer loop; built from iota comparisons only).
        idx = lax.broadcasted_iota(jnp.int32, (1, NLp), 1)
        interior = (idx >= pad) & (idx < pad + L)
        for n in range(1, N):
            lo = n * Lp + pad
            interior = interior | ((idx >= lo) & (idx < lo + L))
        mask = jnp.where(interior, 1.0, 0.0)         # (1, NLp) f32

        for li in range(n_layers):
            c_in, c_out = chans[li], chans[li + 1]
            w_ref = layer_refs[3 * li + 0]           # (K, C_out, C_in)
            g_ref = layer_refs[3 * li + 1]           # (C_out, 1)
            b_ref = layer_refs[3 * li + 2]           # (C_out, 1)

            # Conv1d: K lane-dense MXU matmuls over shifted windows.
            y = jnp.dot(w_ref[0], act_s[0:c_in, 0:NLp],
                        preferred_element_type=jnp.float32)
            for k in range(1, K):
                y = y + jnp.dot(w_ref[k], act_s[0:c_in, k:k + NLp],
                                preferred_element_type=jnp.float32)
            # Conv bias omitted: cancelled exactly by BN's batch-mean subtract.

            # BatchNorm1d, training mode: biased stats over interior columns.
            mean = jnp.sum(y * mask, axis=1, keepdims=True) * inv_cnt
            cent = (y - mean) * mask
            var = jnp.sum(cent * cent, axis=1, keepdims=True) * inv_cnt
            scale = g_ref[...] * lax.rsqrt(var + eps)        # (C_out, 1)
            z = (y - mean) * scale + b_ref[...]

            # ReLU; re-zero pad columns so they serve as next layer's padding.
            act_s[0:c_out, pad:pad + NLp] = jnp.maximum(z, 0.0) * mask

        # Un-flatten the final activation back to the module's (N, C, L).
        c_last = chans[-1]
        for n in range(N):
            start = pad + n * Lp + pad
            o_ref[n] = act_s[0:c_last, start:start + L]

    return kernel


def conv_layers_forward(x, kparams):
    """Fused forward for the whole ConvLayers stack (single pallas_call).

    kparams: tuple of (w_t, gamma, beta) per layer with
      w_t   : (K, C_out, C_in)  conv weight, tap-major (pre-transposed)
      gamma : (C_out, 1), beta : (C_out, 1)
    """
    N, c_in0, L = x.shape
    K = int(kparams[0][0].shape[0])
    chans = (int(c_in0),) + tuple(int(w.shape[1]) for (w, _, _) in kparams)
    pad = K // 2
    Lp = L + 2 * pad
    c_max = max(chans)

    flat_inputs = [x]
    for (w, g, b) in kparams:
        flat_inputs += [w, g, b]

    return pl.pallas_call(
        _make_fused_kernel(N, L, K, chans),
        out_shape=jax.ShapeDtypeStruct((N, chans[-1], L), jnp.float32),
        # No grid / BlockSpecs: every operand is a full-array VMEM block
        # (shapes are tiny; no pipelining machinery wanted at this size).
        scratch_shapes=[pltpu.VMEM((c_max, N * Lp + 2 * pad), jnp.float32)],
    )(*flat_inputs)


def prepare_params(params):
    """One-time layout prep: weight -> (K, C_out, C_in); BN affine -> (C, 1).

    The conv bias is dropped here: with train-mode BatchNorm (batch statistics)
    it is cancelled exactly by the mean subtraction.
    """
    prepped = []
    for (w, b, gamma, beta) in params:
        c_out = w.shape[0]
        prepped.append((jnp.transpose(w, (2, 0, 1)),        # (K, C_out, C_in)
                        gamma.reshape(c_out, 1),
                        beta.reshape(c_out, 1)))
    return tuple(prepped)


def _ref_forward(x, params, kernel_size):
    """Pure-JAX reference mirroring the PyTorch module (train-mode BN)."""
    pad = kernel_size // 2
    for (w, b, gamma, beta) in params:
        y = jax.lax.conv_general_dilated(
            x, w, window_strides=(1,), padding=[(pad, pad)],
            dimension_numbers=("NCH", "OIH", "NCH"))
        y = y + b[None, :, None]
        mean = jnp.mean(y, axis=(0, 2), keepdims=True)
        var = jnp.mean(jnp.square(y - mean), axis=(0, 2), keepdims=True)
        y = (y - mean) / jnp.sqrt(var + 1e-5)
        y = y * gamma[None, :, None] + beta[None, :, None]
        x = jnp.maximum(y, 0.0)
    return x


def init_params(key, in_channels, out_channels, kernel_size, layers):
    """Deterministic parameter init (PyTorch-like uniform fan-in bound)."""
    params = []
    c_in = in_channels
    for _ in range(layers):
        key, kw, kb = jax.random.split(key, 3)
        bound = 1.0 / np.sqrt(c_in * kernel_size)
        w = jax.random.uniform(kw, (out_channels, c_in, kernel_size),
                               jnp.float32, -bound, bound)
        b = jax.random.uniform(kb, (out_channels,), jnp.float32, -bound, bound)
        gamma = jnp.ones((out_channels,), jnp.float32)   # fresh BN: weight=1
        beta = jnp.zeros((out_channels,), jnp.float32)   # fresh BN: bias=0
        params.append((w, b, gamma, beta))
        c_in = out_channels
    return tuple(params)


if __name__ == "__main__":
    # Small shapes consistent with the module: ConvLayers(4, 8, 3, layers=2)
    N, C_IN, C_OUT, K, LAYERS, L = 2, 4, 8, 3, 2, 16

    key = jax.random.PRNGKey(0)
    key, kx = jax.random.split(key)
    x = jax.random.normal(kx, (N, C_IN, L), jnp.float32)
    params = init_params(key, C_IN, C_OUT, K, LAYERS)
    kparams = prepare_params(params)          # one-time layout prep

    fwd = jax.jit(conv_layers_forward)
    out = jax.block_until_ready(fwd(x, kparams))

    ref = jax.block_until_ready(_ref_forward(x, params, K))
    np.testing.assert_allclose(np.asarray(out), np.asarray(ref),
                               rtol=1e-4, atol=1e-4)

    assert out.shape == (N, C_OUT, L)
    print("KERNEL_OK")
</pallas_src>

<mosaic_0001>
module attributes {stable_mosaic.version = 11 : i64} {
  func.func @kernel(%arg0: memref<2x4x16xf32, #tpu.memory_space<vmem>>, %arg1: memref<3x8x4xf32, #tpu.memory_space<vmem>>, %arg2: memref<8x1xf32, #tpu.memory_space<vmem>>, %arg3: memref<8x1xf32, #tpu.memory_space<vmem>>, %arg4: memref<3x8x8xf32, #tpu.memory_space<vmem>>, %arg5: memref<8x1xf32, #tpu.memory_space<vmem>>, %arg6: memref<8x1xf32, #tpu.memory_space<vmem>>, %arg7: memref<2x8x16xf32, #tpu.memory_space<vmem>>, %arg8: memref<8x38xf32, #tpu.memory_space<vmem>>) attributes {dimension_semantics = [], scalar_prefetch = 0 : i64, scratch_operands = 1 : i64, tpu.core_type = #tpu.core_type<tc>} {
    %cst = arith.constant 0.000000e+00 : f32
    %0 = vector.broadcast %cst : f32 to vector<8x38xf32>
    %c0 = arith.constant 0 : index
    %c0_0 = arith.constant 0 : index
    %1 = vector.load %arg8[%c0, %c0_0] : memref<8x38xf32, #tpu.memory_space<vmem>>, vector<8x38xf32>
    tpu.vector_store %arg8[%c0, %c0_0], %0 {strides = array<i32>} : memref<8x38xf32, #tpu.memory_space<vmem>>, vector<8x38xf32>,
    %c0_1 = arith.constant 0 : index
    %c0_2 = arith.constant 0 : index
    %c0_3 = arith.constant 0 : index
    %2 = vector.load %arg0[%c0_1, %c0_2, %c0_3] : memref<2x4x16xf32, #tpu.memory_space<vmem>>, vector<1x4x16xf32>
    %3 = vector.shape_cast %2 : vector<1x4x16xf32> to vector<4x16xf32>
    %c0_4 = arith.constant 0 : index
    %c2 = arith.constant 2 : index
    %4 = vector.load %arg8[%c0_4, %c2] : memref<8x38xf32, #tpu.memory_space<vmem>>, vector<4x16xf32>
    tpu.vector_store %arg8[%c0_4, %c2], %3 {strides = array<i32>} : memref<8x38xf32, #tpu.memory_space<vmem>>, vector<4x16xf32>,
    %c1 = arith.constant 1 : index
    %c0_5 = arith.constant 0 : index
    %c0_6 = arith.constant 0 : index
    %5 = vector.load %arg0[%c1, %c0_5, %c0_6] : memref<2x4x16xf32, #tpu.memory_space<vmem>>, vector<1x4x16xf32>
    %6 = vector.shape_cast %5 : vector<1x4x16xf32> to vector<4x16xf32>
    %c0_7 = arith.constant 0 : index
    %c20 = arith.constant 20 : index
    %7 = vector.load %arg8[%c0_7, %c20] : memref<8x38xf32, #tpu.memory_space<vmem>>, vector<4x16xf32>
    tpu.vector_store %arg8[%c0_7, %c20], %6 {strides = array<i32>} : memref<8x38xf32, #tpu.memory_space<vmem>>, vector<4x16xf32>,
    %8 = tpu.iota {dimensions = array<i32: 1>} : vector<1x36xi32>
    %c1_i32 = arith.constant 1 : i32
    %9 = vector.broadcast %c1_i32 : i32 to vector<1x36xi32>
    %10 = arith.cmpi sge, %8, %9 : vector<1x36xi32>
    %c17_i32 = arith.constant 17 : i32
    %11 = vector.broadcast %c17_i32 : i32 to vector<1x36xi32>
    %12 = arith.cmpi slt, %8, %11 : vector<1x36xi32>
    %13 = arith.andi %10, %12 : vector<1x36xi1>
    %c19_i32 = arith.constant 19 : i32
    %14 = vector.broadcast %c19_i32 : i32 to vector<1x36xi32>
    %15 = arith.cmpi sge, %8, %14 : vector<1x36xi32>
    %c35_i32 = arith.constant 35 : i32
    %16 = vector.broadcast %c35_i32 : i32 to vector<1x36xi32>
    %17 = arith.cmpi slt, %8, %16 : vector<1x36xi32>
    %18 = arith.andi %15, %17 : vector<1x36xi1>
    %19 = arith.ori %13, %18 : vector<1x36xi1>
    %cst_8 = arith.constant 1.000000e+00 : f32
    %cst_9 = arith.constant 0.000000e+00 : f32
    %20 = vector.broadcast %cst_8 : f32 to vector<1x36xf32>
    %21 = vector.broadcast %cst_9 : f32 to vector<1x36xf32>
    %22 = arith.select %19, %20, %21 : vector<1x36xi1>, vector<1x36xf32>
    %c0_10 = arith.constant 0 : index
    %c0_11 = arith.constant 0 : index
    %c0_12 = arith.constant 0 : index
    %23 = vector.load %arg1[%c0_10, %c0_11, %c0_12] : memref<3x8x4xf32, #tpu.memory_space<vmem>>, vector<1x8x4xf32>
    %24 = vector.shape_cast %23 : vector<1x8x4xf32> to vector<8x4xf32>
    %c0_13 = arith.constant 0 : index
    %c0_14 = arith.constant 0 : index
    %25 = vector.load %arg8[%c0_13, %c0_14] : memref<8x38xf32, #tpu.memory_space<vmem>>, vector<4x36xf32>
    %cst_15 = arith.constant dense<0.000000e+00> : vector<8x36xf32>
    %26 = tpu.matmul %24, %25, %cst_15 {dimension_numbers = #tpu.dot_dimension_numbers<[1], [0], [0], [1], [0, 0, 1, 1], [], []>} : vector<8x4xf32>, vector<4x36xf32>, vector<8x36xf32> -> vector<8x36xf32>
    %c1_16 = arith.constant 1 : index
    %c0_17 = arith.constant 0 : index
    %c0_18 = arith.constant 0 : index
    %27 = vector.load %arg1[%c1_16, %c0_17, %c0_18] : memref<3x8x4xf32, #tpu.memory_space<vmem>>, vector<1x8x4xf32>
    %28 = vector.shape_cast %27 : vector<1x8x4xf32> to vector<8x4xf32>
    %c0_19 = arith.constant 0 : index
    %c1_20 = arith.constant 1 : index
    %29 = vector.load %arg8[%c0_19, %c1_20] : memref<8x38xf32, #tpu.memory_space<vmem>>, vector<4x36xf32>
    %cst_21 = arith.constant dense<0.000000e+00> : vector<8x36xf32>
    %30 = tpu.matmul %28, %29, %cst_21 {dimension_numbers = #tpu.dot_dimension_numbers<[1], [0], [0], [1], [0, 0, 1, 1], [], []>} : vector<8x4xf32>, vector<4x36xf32>, vector<8x36xf32> -> vector<8x36xf32>
    %31 = arith.addf %26, %30 : vector<8x36xf32>
    %c2_22 = arith.constant 2 : index
    %c0_23 = arith.constant 0 : index
    %c0_24 = arith.constant 0 : index
    %32 = vector.load %arg1[%c2_22, %c0_23, %c0_24] : memref<3x8x4xf32, #tpu.memory_space<vmem>>, vector<1x8x4xf32>
    %33 = vector.shape_cast %32 : vector<1x8x4xf32> to vector<8x4xf32>
    %c0_25 = arith.constant 0 : index
    %c2_26 = arith.constant 2 : index
    %34 = vector.load %arg8[%c0_25, %c2_26] : memref<8x38xf32, #tpu.memory_space<vmem>>, vector<4x36xf32>
    %cst_27 = arith.constant dense<0.000000e+00> : vector<8x36xf32>
    %35 = tpu.matmul %33, %34, %cst_27 {dimension_numbers = #tpu.dot_dimension_numbers<[1], [0], [0], [1], [0, 0, 1, 1], [], []>} : vector<8x4xf32>, vector<4x36xf32>, vector<8x36xf32> -> vector<8x36xf32>
    %36 = arith.addf %31, %35 : vector<8x36xf32>
    %37 = vector.broadcast %22 : vector<1x36xf32> to vector<8x36xf32>
    %38 = arith.mulf %36, %37 : vector<8x36xf32>
    %cst_28 = arith.constant dense<0.000000e+00> : vector<8xf32>
    %39 = vector.multi_reduction <add>, %38, %cst_28 [1] : vector<8x36xf32> to vector<8xf32>
    %40 = vector.shape_cast %39 : vector<8xf32> to vector<8x1xf32>
    %cst_29 = arith.constant 3.125000e-02 : f32
    %41 = vector.broadcast %cst_29 : f32 to vector<8x1xf32>
    %42 = arith.mulf %40, %41 : vector<8x1xf32>
    %43 = vector.broadcast %42 : vector<8x1xf32> to vector<8x36xf32>
    %44 = arith.subf %36, %43 : vector<8x36xf32>
    %45 = vector.broadcast %22 : vector<1x36xf32> to vector<8x36xf32>
    %46 = arith.mulf %44, %45 : vector<8x36xf32>
    %47 = arith.mulf %46, %46 : vector<8x36xf32>
    %cst_30 = arith.constant dense<0.000000e+00> : vector<8xf32>
    %48 = vector.multi_reduction <add>, %47, %cst_30 [1] : vector<8x36xf32> to vector<8xf32>
    %49 = vector.shape_cast %48 : vector<8xf32> to vector<8x1xf32>
    %cst_31 = arith.constant 3.125000e-02 : f32
    %50 = vector.broadcast %cst_31 : f32 to vector<8x1xf32>
    %51 = arith.mulf %49, %50 : vector<8x1xf32>
    %c0_32 = arith.constant 0 : index
    %c0_33 = arith.constant 0 : index
    %52 = vector.load %arg2[%c0_32, %c0_33] : memref<8x1xf32, #tpu.memory_space<vmem>>, vector<8x1xf32>
    %cst_34 = arith.constant 9.99999974E-6 : f32
    %53 = vector.broadcast %cst_34 : f32 to vector<8x1xf32>
    %54 = arith.addf %51, %53 : vector<8x1xf32>
    %55 = math.rsqrt %54 : vector<8x1xf32>
    %56 = arith.mulf %52, %55 : vector<8x1xf32>
    %57 = vector.broadcast %42 : vector<8x1xf32> to vector<8x36xf32>
    %58 = arith.subf %36, %57 : vector<8x36xf32>
    %59 = vector.broadcast %56 : vector<8x1xf32> to vector<8x36xf32>
    %60 = arith.mulf %58, %59 : vector<8x36xf32>
    %c0_35 = arith.constant 0 : index
    %c0_36 = arith.constant 0 : index
    %61 = vector.load %arg3[%c0_35, %c0_36] : memref<8x1xf32, #tpu.memory_space<vmem>>, vector<8x1xf32>
    %62 = vector.broadcast %61 : vector<8x1xf32> to vector<8x36xf32>
    %63 = arith.addf %60, %62 : vector<8x36xf32>
    %cst_37 = arith.constant 0.000000e+00 : f32
    %64 = vector.broadcast %cst_37 : f32 to vector<8x36xf32>
    %65 = arith.maximumf %63, %64 : vector<8x36xf32>
    %66 = vector.broadcast %22 : vector<1x36xf32> to vector<8x36xf32>
    %67 = arith.mulf %65, %66 : vector<8x36xf32>
    %c0_38 = arith.constant 0 : index
    %c1_39 = arith.constant 1 : index
    %68 = vector.load %arg8[%c0_38, %c1_39] : memref<8x38xf32, #tpu.memory_space<vmem>>, vector<8x36xf32>
    tpu.vector_store %arg8[%c0_38, %c1_39], %67 {strides = array<i32>} : memref<8x38xf32, #tpu.memory_space<vmem>>, vector<8x36xf32>,
    %c0_40 = arith.constant 0 : index
    %c0_41 = arith.constant 0 : index
    %c0_42 = arith.constant 0 : index
    %69 = vector.load %arg4[%c0_40, %c0_41, %c0_42] : memref<3x8x8xf32, #tpu.memory_space<vmem>>, vector<1x8x8xf32>
    %70 = vector.shape_cast %69 : vector<1x8x8xf32> to vector<8x8xf32>
    %c0_43 = arith.constant 0 : index
    %c0_44 = arith.constant 0 : index
    %71 = vector.load %arg8[%c0_43, %c0_44] : memref<8x38xf32, #tpu.memory_space<vmem>>, vector<8x36xf32>
    %cst_45 = arith.constant dense<0.000000e+00> : vector<8x36xf32>
    %72 = tpu.matmul %70, %71, %cst_45 {dimension_numbers = #tpu.dot_dimension_numbers<[1], [0], [0], [1], [0, 0, 1, 1], [], []>} : vector<8x8xf32>, vector<8x36xf32>, vector<8x36xf32> -> vector<8x36xf32>
    %c1_46 = arith.constant 1 : index
    %c0_47 = arith.constant 0 : index
    %c0_48 = arith.constant 0 : index
    %73 = vector.load %arg4[%c1_46, %c0_47, %c0_48] : memref<3x8x8xf32, #tpu.memory_space<vmem>>, vector<1x8x8xf32>
    %74 = vector.shape_cast %73 : vector<1x8x8xf32> to vector<8x8xf32>
    %c0_49 = arith.constant 0 : index
    %c1_50 = arith.constant 1 : index
    %75 = vector.load %arg8[%c0_49, %c1_50] : memref<8x38xf32, #tpu.memory_space<vmem>>, vector<8x36xf32>
    %cst_51 = arith.constant dense<0.000000e+00> : vector<8x36xf32>
    %76 = tpu.matmul %74, %75, %cst_51 {dimension_numbers = #tpu.dot_dimension_numbers<[1], [0], [0], [1], [0, 0, 1, 1], [], []>} : vector<8x8xf32>, vector<8x36xf32>, vector<8x36xf32> -> vector<8x36xf32>
    %77 = arith.addf %72, %76 : vector<8x36xf32>
    %c2_52 = arith.constant 2 : index
    %c0_53 = arith.constant 0 : index
    %c0_54 = arith.constant 0 : index
    %78 = vector.load %arg4[%c2_52, %c0_53, %c0_54] : memref<3x8x8xf32, #tpu.memory_space<vmem>>, vector<1x8x8xf32>
    %79 = vector.shape_cast %78 : vector<1x8x8xf32> to vector<8x8xf32>
    %c0_55 = arith.constant 0 : index
    %c2_56 = arith.constant 2 : index
    %80 = vector.load %arg8[%c0_55, %c2_56] : memref<8x38xf32, #tpu.memory_space<vmem>>, vector<8x36xf32>
    %cst_57 = arith.constant dense<0.000000e+00> : vector<8x36xf32>
    %81 = tpu.matmul %79, %80, %cst_57 {dimension_numbers = #tpu.dot_dimension_numbers<[1], [0], [0], [1], [0, 0, 1, 1], [], []>} : vector<8x8xf32>, vector<8x36xf32>, vector<8x36xf32> -> vector<8x36xf32>
    %82 = arith.addf %77, %81 : vector<8x36xf32>
    %83 = vector.broadcast %22 : vector<1x36xf32> to vector<8x36xf32>
    %84 = arith.mulf %82, %83 : vector<8x36xf32>
    %cst_58 = arith.constant dense<0.000000e+00> : vector<8xf32>
    %85 = vector.multi_reduction <add>, %84, %cst_58 [1] : vector<8x36xf32> to vector<8xf32>
    %86 = vector.shape_cast %85 : vector<8xf32> to vector<8x1xf32>
    %cst_59 = arith.constant 3.125000e-02 : f32
    %87 = vector.broadcast %cst_59 : f32 to vector<8x1xf32>
    %88 = arith.mulf %86, %87 : vector<8x1xf32>
    %89 = vector.broadcast %88 : vector<8x1xf32> to vector<8x36xf32>
    %90 = arith.subf %82, %89 : vector<8x36xf32>
    %91 = vector.broadcast %22 : vector<1x36xf32> to vector<8x36xf32>
    %92 = arith.mulf %90, %91 : vector<8x36xf32>
    %93 = arith.mulf %92, %92 : vector<8x36xf32>
    %cst_60 = arith.constant dense<0.000000e+00> : vector<8xf32>
    %94 = vector.multi_reduction <add>, %93, %cst_60 [1] : vector<8x36xf32> to vector<8xf32>
    %95 = vector.shape_cast %94 : vector<8xf32> to vector<8x1xf32>
    %cst_61 = arith.constant 3.125000e-02 : f32
    %96 = vector.broadcast %cst_61 : f32 to vector<8x1xf32>
    %97 = arith.mulf %95, %96 : vector<8x1xf32>
    %c0_62 = arith.constant 0 : index
    %c0_63 = arith.constant 0 : index
    %98 = vector.load %arg5[%c0_62, %c0_63] : memref<8x1xf32, #tpu.memory_space<vmem>>, vector<8x1xf32>
    %cst_64 = arith.constant 9.99999974E-6 : f32
    %99 = vector.broadcast %cst_64 : f32 to vector<8x1xf32>
    %100 = arith.addf %97, %99 : vector<8x1xf32>
    %101 = math.rsqrt %100 : vector<8x1xf32>
    %102 = arith.mulf %98, %101 : vector<8x1xf32>
    %103 = vector.broadcast %88 : vector<8x1xf32> to vector<8x36xf32>
    %104 = arith.subf %82, %103 : vector<8x36xf32>
    %105 = vector.broadcast %102 : vector<8x1xf32> to vector<8x36xf32>
    %106 = arith.mulf %104, %105 : vector<8x36xf32>
    %c0_65 = arith.constant 0 : index
    %c0_66 = arith.constant 0 : index
    %107 = vector.load %arg6[%c0_65, %c0_66] : memref<8x1xf32, #tpu.memory_space<vmem>>, vector<8x1xf32>
    %108 = vector.broadcast %107 : vector<8x1xf32> to vector<8x36xf32>
    %109 = arith.addf %106, %108 : vector<8x36xf32>
    %cst_67 = arith.constant 0.000000e+00 : f32
    %110 = vector.broadcast %cst_67 : f32 to vector<8x36xf32>
    %111 = arith.maximumf %109, %110 : vector<8x36xf32>
    %112 = vector.broadcast %22 : vector<1x36xf32> to vector<8x36xf32>
    %113 = arith.mulf %111, %112 : vector<8x36xf32>
    %c0_68 = arith.constant 0 : index
    %c1_69 = arith.constant 1 : index
    %114 = vector.load %arg8[%c0_68, %c1_69] : memref<8x38xf32, #tpu.memory_space<vmem>>, vector<8x36xf32>
    tpu.vector_store %arg8[%c0_68, %c1_69], %113 {strides = array<i32>} : memref<8x38xf32, #tpu.memory_space<vmem>>, vector<8x36xf32>,
    %c0_70 = arith.constant 0 : index
    %c2_71 = arith.constant 2 : index
    %115 = vector.load %arg8[%c0_70, %c2_71] : memref<8x38xf32, #tpu.memory_space<vmem>>, vector<8x16xf32>
    %c0_72 = arith.constant 0 : index
    %c0_73 = arith.constant 0 : index
    %c0_74 = arith.constant 0 : index
    %116 = vector.load %arg7[%c0_72, %c0_73, %c0_74] : memref<2x8x16xf32, #tpu.memory_space<vmem>>, vector<1x8x16xf32>
    %117 = vector.shape_cast %116 : vector<1x8x16xf32> to vector<8x16xf32>
    %118 = vector.shape_cast %115 : vector<8x16xf32> to vector<1x8x16xf32>
    tpu.vector_store %arg7[%c0_72, %c0_73, %c0_74], %118 {strides = array<i32>} : memref<2x8x16xf32, #tpu.memory_space<vmem>>, vector<1x8x16xf32>,
    %c0_75 = arith.constant 0 : index
    %c20_76 = arith.constant 20 : index
    %119 = vector.load %arg8[%c0_75, %c20_76] : memref<8x38xf32, #tpu.memory_space<vmem>>, vector<8x16xf32>
    %c1_77 = arith.constant 1 : index
    %c0_78 = arith.constant 0 : index
    %c0_79 = arith.constant 0 : index
    %120 = vector.load %arg7[%c1_77, %c0_78, %c0_79] : memref<2x8x16xf32, #tpu.memory_space<vmem>>, vector<1x8x16xf32>
    %121 = vector.shape_cast %120 : vector<1x8x16xf32> to vector<8x16xf32>
    %122 = vector.shape_cast %119 : vector<8x16xf32> to vector<1x8x16xf32>
    tpu.vector_store %arg7[%c1_77, %c0_78, %c0_79], %122 {strides = array<i32>} : memref<2x8x16xf32, #tpu.memory_space<vmem>>, vector<1x8x16xf32>,
    return
  }
}

</mosaic_0001>

<llo_original>
// kernel: conv_layers_forward.1
$region0: #{conv_layers_forward.1}
  #allocation0 [shape = 'u32[]', space=smem, size = 0x4, offset = 0x4, fixed_abs, tag = 'smem constant byte address 0x4 - core index']
  #allocation1 [shape = 'u32[144,128]{1,0:T(1,128)}', space=vmem, size = 0x12000, scoped, tag = 'internal scratch']
  #allocation2 [shape = 'f32[8,38]{1,0:T(8,128)}', space=vmem, size = 0x1000, scoped, tag = 'scratch operand']
  %s0 = inlined_call_operand.vmem [shape: f32[2,4,16], index: 0, kind: input, shape index: {}]
  %s1 = inlined_call_operand.vmem [shape: f32[3,8,4], index: 1, kind: input, shape index: {}]
  %s2 = inlined_call_operand.vmem [shape: f32[8,1], index: 2, kind: input, shape index: {}]
  %s3 = inlined_call_operand.vmem [shape: f32[8,1], index: 3, kind: input, shape index: {}]
  %s4 = inlined_call_operand.vmem [shape: f32[3,8,8], index: 4, kind: input, shape index: {}]
  %s5 = inlined_call_operand.vmem [shape: f32[8,1], index: 5, kind: input, shape index: {}]
  %s6 = inlined_call_operand.vmem [shape: f32[8,1], index: 6, kind: input, shape index: {}]
  %s7 = inlined_call_operand.hbm [shape: f32[2,8,16], index: 7, kind: output, shape index: {}]
  %s8 = sld [smem:[#allocation0]]
  $region38: #{conv_layers_forward.1} parent=0
    _
  %s10 = ssub.s32 1, %s8
  %s11 = scalar_select 0, %s10, %s8
  $region1: #{conv_layers_forward.1} parent=0
    #allocation3 [shape = 'u8[8192]{0}', space=vmem, size = 0x2000, scoped, tag = 'output window, operand 0, single buffered']
    #allocation4 [shape = 's32[1]{0}', space=sflag, size = 0x4, scoped, tag = 'scoped memory for conv_layers_forward.1']
    %12 = vsyncpa [#allocation4], 0
    // Predicated region
    $region2: #{conv_layers_forward.1} parent=1 // pred_check
      _
    $region3: #{conv_layers_forward.1} parent=1 // pred_check_branch
      %14 = sbr.rel (0) target = $region5
    $region4: #{conv_layers_forward.1} parent=1 // pred_region
      _
    $region5: #{conv_layers_forward.1} parent=1 // pred_fallthru
      _
    // Predicated region
    $region6: #{conv_layers_forward.1} parent=1 // pred_check
      _
    $region7: #{conv_layers_forward.1} parent=1 // pred_check_branch
      %16 = sbr.rel (0) target = $region9
    $region8: #{conv_layers_forward.1} parent=1 // pred_region
      _
    $region9: #{conv_layers_forward.1} parent=1 // pred_fallthru
      _
    // Predicated region
    $region10: #{conv_layers_forward.1} parent=1 // pred_check
      _
    $region11: #{conv_layers_forward.1} parent=1 // pred_check_branch
      %18 = sbr.rel (0) target = $region13
    $region12: #{conv_layers_forward.1} parent=1 // pred_region
      _
    $region13: #{conv_layers_forward.1} parent=1 // pred_fallthru
      _
    // Predicated region
    $region14: #{conv_layers_forward.1} parent=1 // pred_check
      _
    $region15: #{conv_layers_forward.1} parent=1 // pred_check_branch
      %20 = sbr.rel (0) target = $region17
    $region16: #{conv_layers_forward.1} parent=1 // pred_region
      _
    $region17: #{conv_layers_forward.1} parent=1 // pred_fallthru
      _
    // Predicated region
    $region18: #{conv_layers_forward.1} parent=1 // pred_check
      _
    $region19: #{conv_layers_forward.1} parent=1 // pred_check_branch
      %22 = sbr.rel (0) target = $region21
    $region20: #{conv_layers_forward.1} parent=1 // pred_region
      _
    $region21: #{conv_layers_forward.1} parent=1 // pred_fallthru
      _
    // Predicated region
    $region22: #{conv_layers_forward.1} parent=1 // pred_check
      _
    $region23: #{conv_layers_forward.1} parent=1 // pred_check_branch
      %24 = sbr.rel (0) target = $region25
    $region24: #{conv_layers_forward.1} parent=1 // pred_region
      _
    $region25: #{conv_layers_forward.1} parent=1 // pred_fallthru
      _
    // Predicated region
    $region26: #{conv_layers_forward.1} parent=1 // pred_check
      _
    $region27: #{conv_layers_forward.1} parent=1 // pred_check_branch
      %26 = sbr.rel (0) target = $region29
    $region28: #{conv_layers_forward.1} parent=1 // pred_region
      _
    $region29: #{conv_layers_forward.1} parent=1 // pred_fallthru
      _
    %vm27 = vcmask 310272
    %28 = vst.msk [vmem:[#allocation2] sm:$0xff] %vm27, 0.0
    %v29 = vld [vmem:[%s0] sm:$0xf]
    %31 = vrot.lane.b32.xlu0 %v29, 2
    %v32 = vpop.permute.xlu0 %31
    %vm34 = vcmask 142352
    %35 = vst.msk [vmem:[#allocation2] sm:$0xf] %vm34, %v32
    %s36 = scalar_lea.vmem %s0, 4
    %v37 = vld [vmem:[%s36] sm:$0xf]
    %39 = vrot.lane.b32.xlu0 %v37, 20
    %v40 = vpop.permute.xlu0 %39
    %vm42 = vcmask 289952
    %43 = vst.msk [vmem:[#allocation2] sm:$0xf] %vm42, %v40
    %v44 = vlaneseq
    %v45 = vand.u32 %v44, 127
    %vm46 = vcmp.ge.s32.totalorder %v45, 1
    %vm47 = vcmp.lt.s32.totalorder %v45, 17
    %vm48 = vmand %vm46, %vm47
    %vm49 = vcmp.ge.s32.totalorder %v45, 19
    %vm50 = vcmp.lt.s32.totalorder %v45, 35
    %vm51 = vmand %vm49, %vm50
    %vm52 = vmor %vm48, %vm51
    %v53 = vsel %vm52, 1.0, 0.0
    %v54 = vld [vmem:[%s1] sm:$0xff]
    %v55 = vld [vmem:[#allocation2] sm:$0xf]
    %s56 = scalar_lea.vmem %s1, 8
    %v57 = vld [vmem:[%s56] sm:$0xff]
    %59 = vrot.lane.b32.xlu0 %v55, 127
    %v60 = vpop.permute.xlu0 %59
    %vm61 = vcmask 31744
    %v63 = vsel %vm61, %v57, 0
    %vm65 = vcmask 1043456
    %v66 = vsel %vm65, %v60, 0
    %68 = vmatprep.subr.mxu0 0.0
    %69 = vmatpush1.msra.mxu0 %v66
    %70 = vmatprep.subr.mxu0 0.0
    %71 = vmatpush1.msra.mxu0 0.0
    %72 = vmatprep.subr.mxu0 0.0
    %73 = vmatpush1.msra.mxu0 0.0
    %74 = vmatprep.subr.mxu0 0.0
    %75 = vmatpush1.msra.mxu0 0.0
    %76 = vmatprep.subr.mxu0 0.0
    %77 = vmatpush1.msra.mxu0 0.0
    %78 = vmatprep.subr.mxu0 0.0
    %79 = vmatpush1.msra.mxu0 0.0
    %80 = vmatprep.subr.mxu0 0.0
    %81 = vmatpush1.msra.mxu0 0.0
    %82 = vmatprep.subr.mxu0 0.0
    %83 = vmatpush1.msra.mxu0 0.0
    %84 = vmatprep.subr.mxu0 0.0
    %85 = vmatpush1.msra.mxu0 0.0
    %86 = vmatprep.subr.mxu0 0.0
    %87 = vmatpush1.msra.mxu0 0.0
    %88 = vmatprep.subr.mxu0 0.0
    %89 = vmatpush1.msra.mxu0 0.0
    %90 = vmatprep.subr.mxu0 0.0
    %91 = vmatpush1.msra.mxu0 0.0
    %92 = vmatprep.subr.mxu0 0.0
    %93 = vmatpush1.msra.mxu0 0.0
    %94 = vmatprep.subr.mxu0 0.0
    %95 = vmatpush1.msra.mxu0 0.0
    %96 = vmatprep.subr.mxu0 0.0
    %97 = vmatpush1.msra.mxu0 0.0
    %98 = vmatprep.subr.mxu0 0.0
    %99 = vmatpush1.msra.mxu0 0.0
    %100 = vmatprep.subr.mxu0 0.0
    %101 = vmatpush1.msra.mxu0 0.0
    %102 = vmatprep.subr.mxu0 0.0
    %103 = vmatpush1.msra.mxu0 0.0
    %104 = vmatprep.subr.mxu0 0.0
    %105 = vmatpush1.msra.mxu0 0.0
    %106 = vmatprep.subr.mxu0 0.0
    %107 = vmatpush1.msra.mxu0 0.0
    %108 = vmatprep.subr.mxu0 0.0
    %109 = vmatpush1.msra.mxu0 0.0
    %110 = vmatprep.subr.mxu0 0.0
    %111 = vmatpush1.msra.mxu0 0.0
    %112 = vmatprep.subr.mxu0 0.0
    %113 = vmatpush1.msra.mxu0 0.0
    %114 = vmatprep.subr.mxu0 0.0
    %115 = vmatpush1.msra.mxu0 0.0
    %116 = vmatprep.subr.mxu0 0.0
    %117 = vmatpush1.msra.mxu0 0.0
    %118 = vmatprep.subr.mxu0 0.0
    %119 = vmatpush1.msra.mxu0 0.0
    %120 = vmatprep.subr.mxu0 0.0
    %121 = vmatpush1.msra.mxu0 0.0
    %122 = vmatprep.subr.mxu0 0.0
    %123 = vmatpush1.msra.mxu0 0.0
    %124 = vmatprep.subr.mxu0 0.0
    %125 = vmatpush1.msra.mxu0 0.0
    %126 = vmatprep.subr.mxu0 0.0
    %127 = vmatpush1.msra.mxu0 0.0
    %128 = vmatprep.subr.mxu0 0.0
    %129 = vmatpush1.msra.mxu0 0.0
    %130 = vmatprep.subr.mxu0 0.0
    %131 = vmatpush1.msra.mxu0 0.0
    %132 = vmatprep.mubr.f32.mxu0 0.0
    %133 = vmatmul.mubr.f32.gmra.mrb[0].mxu0 %v63
    %v134 = vpop.f32.mrb[0].mxu0
    %v135 = vadd.f32 0.0, %v134
    %v136 = vpop.f32.mrb[0].mxu0
    %137 = vdwg.mxu0
    %v139 = vsel %vm61, %v54, 0
    %v141 = vsel %vm65, %v55, 0
    %143 = vmatprep.subr.mxu0 0.0
    %144 = vmatpush1.msra.mxu0 %v141
    %145 = vmatprep.subr.mxu0 0.0
    %146 = vmatpush1.msra.mxu0 0.0
    %147 = vmatprep.subr.mxu0 0.0
    %148 = vmatpush1.msra.mxu0 0.0
    %149 = vmatprep.subr.mxu0 0.0
    %150 = vmatpush1.msra.mxu0 0.0
    %151 = vmatprep.subr.mxu0 0.0
    %152 = vmatpush1.msra.mxu0 0.0
    %153 = vmatprep.subr.mxu0 0.0
    %154 = vmatpush1.msra.mxu0 0.0
    %155 = vmatprep.subr.mxu0 0.0
    %156 = vmatpush1.msra.mxu0 0.0
    %157 = vmatprep.subr.mxu0 0.0
    %158 = vmatpush1.msra.mxu0 0.0
    %159 = vmatprep.subr.mxu0 0.0
    %160 = vmatpush1.msra.mxu0 0.0
    %161 = vmatprep.subr.mxu0 0.0
    %162 = vmatpush1.msra.mxu0 0.0
    %163 = vmatprep.subr.mxu0 0.0
    %164 = vmatpush1.msra.mxu0 0.0
    %165 = vmatprep.subr.mxu0 0.0
    %166 = vmatpush1.msra.mxu0 0.0
    %167 = vmatprep.subr.mxu0 0.0
    %168 = vmatpush1.msra.mxu0 0.0
    %169 = vmatprep.subr.mxu0 0.0
    %170 = vmatpush1.msra.mxu0 0.0
    %171 = vmatprep.subr.mxu0 0.0
    %172 = vmatpush1.msra.mxu0 0.0
    %173 = vmatprep.subr.mxu0 0.0
    %174 = vmatpush1.msra.mxu0 0.0
    %175 = vmatprep.subr.mxu0 0.0
    %176 = vmatpush1.msra.mxu0 0.0
    %177 = vmatprep.subr.mxu0 0.0
    %178 = vmatpush1.msra.mxu0 0.0
    %179 = vmatprep.subr.mxu0 0.0
    %180 = vmatpush1.msra.mxu0 0.0
    %181 = vmatprep.subr.mxu0 0.0
    %182 = vmatpush1.msra.mxu0 0.0
    %183 = vmatprep.subr.mxu0 0.0
    %184 = vmatpush1.msra.mxu0 0.0
    %185 = vmatprep.subr.mxu0 0.0
    %186 = vmatpush1.msra.mxu0 0.0
    %187 = vmatprep.subr.mxu0 0.0
    %188 = vmatpush1.msra.mxu0 0.0
    %189 = vmatprep.subr.mxu0 0.0
    %190 = vmatpush1.msra.mxu0 0.0
    %191 = vmatprep.subr.mxu0 0.0
    %192 = vmatpush1.msra.mxu0 0.0
    %193 = vmatprep.subr.mxu0 0.0
    %194 = vmatpush1.msra.mxu0 0.0
    %195 = vmatprep.subr.mxu0 0.0
    %196 = vmatpush1.msra.mxu0 0.0
    %197 = vmatprep.subr.mxu0 0.0
    %198 = vmatpush1.msra.mxu0 0.0
    %199 = vmatprep.subr.mxu0 0.0
    %200 = vmatpush1.msra.mxu0 0.0
    %201 = vmatprep.subr.mxu0 0.0
    %202 = vmatpush1.msra.mxu0 0.0
    %203 = vmatprep.subr.mxu0 0.0
    %204 = vmatpush1.msra.mxu0 0.0
    %205 = vmatprep.subr.mxu0 0.0
    %206 = vmatpush1.msra.mxu0 0.0
    %207 = vmatprep.mubr.f32.mxu0 0.0
    %208 = vmatmul.mubr.f32.gmra.mrb[0].mxu0 %v139
    %v209 = vpop.f32.mrb[0].mxu0
    %v210 = vadd.f32 %v135, %v209
    %v211 = vpop.f32.mrb[0].mxu0
    %212 = vdwg.mxu0
    %s213 = scalar_lea.vmem %s1, 16
    %v214 = vld [vmem:[%s213] sm:$0xff]
    %215 = vrot.lane.b32.xlu0 %v55, 126
    %v216 = vpop.permute.xlu0 %215
    %v218 = vsel %vm61, %v214, 0
    %v220 = vsel %vm65, %v216, 0
    %222 = vmatprep.subr.mxu0 0.0
    %223 = vmatpush1.msra.mxu0 %v220
    %224 = vmatprep.subr.mxu0 0.0
    %225 = vmatpush1.msra.mxu0 0.0
    %226 = vmatprep.subr.mxu0 0.0
    %227 = vmatpush1.msra.mxu0 0.0
    %228 = vmatprep.subr.mxu0 0.0
    %229 = vmatpush1.msra.mxu0 0.0
    %230 = vmatprep.subr.mxu0 0.0
    %231 = vmatpush1.msra.mxu0 0.0
    %232 = vmatprep.subr.mxu0 0.0
    %233 = vmatpush1.msra.mxu0 0.0
    %234 = vmatprep.subr.mxu0 0.0
    %235 = vmatpush1.msra.mxu0 0.0
    %236 = vmatprep.subr.mxu0 0.0
    %237 = vmatpush1.msra.mxu0 0.0
    %238 = vmatprep.subr.mxu0 0.0
    %239 = vmatpush1.msra.mxu0 0.0
    %240 = vmatprep.subr.mxu0 0.0
    %241 = vmatpush1.msra.mxu0 0.0
    %242 = vmatprep.subr.mxu0 0.0
    %243 = vmatpush1.msra.mxu0 0.0
    %244 = vmatprep.subr.mxu0 0.0
    %245 = vmatpush1.msra.mxu0 0.0
    %246 = vmatprep.subr.mxu0 0.0
    %247 = vmatpush1.msra.mxu0 0.0
    %248 = vmatprep.subr.mxu0 0.0
    %249 = vmatpush1.msra.mxu0 0.0
    %250 = vmatprep.subr.mxu0 0.0
    %251 = vmatpush1.msra.mxu0 0.0
    %252 = vmatprep.subr.mxu0 0.0
    %253 = vmatpush1.msra.mxu0 0.0
    %254 = vmatprep.subr.mxu0 0.0
    %255 = vmatpush1.msra.mxu0 0.0
    %256 = vmatprep.subr.mxu0 0.0
    %257 = vmatpush1.msra.mxu0 0.0
    %258 = vmatprep.subr.mxu0 0.0
    %259 = vmatpush1.msra.mxu0 0.0
    %260 = vmatprep.subr.mxu0 0.0
    %261 = vmatpush1.msra.mxu0 0.0
    %262 = vmatprep.subr.mxu0 0.0
    %263 = vmatpush1.msra.mxu0 0.0
    %264 = vmatprep.subr.mxu0 0.0
    %265 = vmatpush1.msra.mxu0 0.0
    %266 = vmatprep.subr.mxu0 0.0
    %267 = vmatpush1.msra.mxu0 0.0
    %268 = vmatprep.subr.mxu0 0.0
    %269 = vmatpush1.msra.mxu0 0.0
    %270 = vmatprep.subr.mxu0 0.0
    %271 = vmatpush1.msra.mxu0 0.0
    %272 = vmatprep.subr.mxu0 0.0
    %273 = vmatpush1.msra.mxu0 0.0
    %274 = vmatprep.subr.mxu0 0.0
    %275 = vmatpush1.msra.mxu0 0.0
    %276 = vmatprep.subr.mxu0 0.0
    %277 = vmatpush1.msra.mxu0 0.0
    %278 = vmatprep.subr.mxu0 0.0
    %279 = vmatpush1.msra.mxu0 0.0
    %280 = vmatprep.subr.mxu0 0.0
    %281 = vmatpush1.msra.mxu0 0.0
    %282 = vmatprep.subr.mxu0 0.0
    %283 = vmatpush1.msra.mxu0 0.0
    %284 = vmatprep.subr.mxu0 0.0
    %285 = vmatpush1.msra.mxu0 0.0
    %286 = vmatprep.mubr.f32.mxu0 0.0
    %287 = vmatmul.mubr.f32.gmra.mrb[0].mxu0 %v218
    %v288 = vpop.f32.mrb[0].mxu0
    %v289 = vadd.f32 0.0, %v288
    %v290 = vpop.f32.mrb[0].mxu0
    %291 = vdwg.mxu0
    %v292 = vadd.f32 %v210, %v289
    %v293 = vmul.f32 %v292, %v53
    %vm294 = vcmask 293888
    %v295 = vsel %vm294, %v293, 0.0
    %296 = vadd.xlane.f32.xlu0 %v295
    %v297 = vpop.xlane.xlu0 %296
    %v298 = vmul.f32 %v297, 0.03125
    %v299 = vsub.f32 %v292, %v298
    %v300 = vmul.f32 %v299, %v53
    %v301 = vmul.f32 %v300, %v300
    %v302 = vsel %vm294, %v301, 0.0
    %303 = vadd.xlane.f32.xlu0 %v302
    %v304 = vpop.xlane.xlu0 %303
    %v305 = vmul.f32 %v304, 0.03125
    %v306 = vld [vmem:[%s2] sm:$0xff]
    %v307 = vadd.f32 %v305, 1e-05
    %v308 = vrsqrt.pop %v307
    %v309 = vmul.f32 %v306, %v308
    %311 = vset.pattern.permute.xlu0 0
    %312 = vperm.xlu0 %311, %v309
    %v313 = vpop.permute.xlu0 %312
    %v315 = vmul.f32 %v299, %v313
    %v316 = vld [vmem:[%s3] sm:$0xff]
    %318 = vset.pattern.permute.xlu0 0
    %319 = vperm.xlu0 %318, %v316
    %v320 = vpop.permute.xlu0 %319
    %v322 = vadd.f32 %v315, %v320
    %v323 = vmax.f32 %v322, 0.0
    %v324 = vmul.f32 %v323, %v53
    %326 = vrot.lane.b32.xlu0 %v324, 1
    %v327 = vpop.permute.xlu0 %326
    %vm329 = vcmask 302088
    %330 = vst.msk [vmem:[#allocation2] sm:$0xff] %vm329, %v327
    %v331 = vld [vmem:[%s4] sm:$0xff]
    %v332 = vld [vmem:[#allocation2] sm:$0xff]
    %s333 = scalar_lea.vmem %s4, 8
    %v334 = vld [vmem:[%s333] sm:$0xff]
    %336 = vrot.lane.b32.xlu0 %v332, 127
    %v337 = vpop.permute.xlu0 %336
    %vm339 = vcmask 64512
    %v341 = vsel %vm339, %v334, 0
    %343 = vmatprep.subr.mxu0 0.0
    %344 = vmatpush1.msra.mxu0 %v337
    %345 = vmatprep.subr.mxu0 0.0
    %346 = vmatpush1.msra.mxu0 0.0
    %347 = vmatprep.subr.mxu0 0.0
    %348 = vmatpush1.msra.mxu0 0.0
    %349 = vmatprep.subr.mxu0 0.0
    %350 = vmatpush1.msra.mxu0 0.0
    %351 = vmatprep.subr.mxu0 0.0
    %352 = vmatpush1.msra.mxu0 0.0
    %353 = vmatprep.subr.mxu0 0.0
    %354 = vmatpush1.msra.mxu0 0.0
    %355 = vmatprep.subr.mxu0 0.0
    %356 = vmatpush1.msra.mxu0 0.0
    %357 = vmatprep.subr.mxu0 0.0
    %358 = vmatpush1.msra.mxu0 0.0
    %359 = vmatprep.subr.mxu0 0.0
    %360 = vmatpush1.msra.mxu0 0.0
    %361 = vmatprep.subr.mxu0 0.0
    %362 = vmatpush1.msra.mxu0 0.0
    %363 = vmatprep.subr.mxu0 0.0
    %364 = vmatpush1.msra.mxu0 0.0
    %365 = vmatprep.subr.mxu0 0.0
    %366 = vmatpush1.msra.mxu0 0.0
    %367 = vmatprep.subr.mxu0 0.0
    %368 = vmatpush1.msra.mxu0 0.0
    %369 = vmatprep.subr.mxu0 0.0
    %370 = vmatpush1.msra.mxu0 0.0
    %371 = vmatprep.subr.mxu0 0.0
    %372 = vmatpush1.msra.mxu0 0.0
    %373 = vmatprep.subr.mxu0 0.0
    %374 = vmatpush1.msra.mxu0 0.0
    %375 = vmatprep.subr.mxu0 0.0
    %376 = vmatpush1.msra.mxu0 0.0
    %377 = vmatprep.subr.mxu0 0.0
    %378 = vmatpush1.msra.mxu0 0.0
    %379 = vmatprep.subr.mxu0 0.0
    %380 = vmatpush1.msra.mxu0 0.0
    %381 = vmatprep.subr.mxu0 0.0
    %382 = vmatpush1.msra.mxu0 0.0
    %383 = vmatprep.subr.mxu0 0.0
    %384 = vmatpush1.msra.mxu0 0.0
    %385 = vmatprep.subr.mxu0 0.0
    %386 = vmatpush1.msra.mxu0 0.0
    %387 = vmatprep.subr.mxu0 0.0
    %388 = vmatpush1.msra.mxu0 0.0
    %389 = vmatprep.subr.mxu0 0.0
    %390 = vmatpush1.msra.mxu0 0.0
    %391 = vmatprep.subr.mxu0 0.0
    %392 = vmatpush1.msra.mxu0 0.0
    %393 = vmatprep.subr.mxu0 0.0
    %394 = vmatpush1.msra.mxu0 0.0
    %395 = vmatprep.subr.mxu0 0.0
    %396 = vmatpush1.msra.mxu0 0.0
    %397 = vmatprep.subr.mxu0 0.0
    %398 = vmatpush1.msra.mxu0 0.0
    %399 = vmatprep.subr.mxu0 0.0
    %400 = vmatpush1.msra.mxu0 0.0
    %401 = vmatprep.subr.mxu0 0.0
    %402 = vmatpush1.msra.mxu0 0.0
    %403 = vmatprep.subr.mxu0 0.0
    %404 = vmatpush1.msra.mxu0 0.0
    %405 = vmatprep.subr.mxu0 0.0
    %406 = vmatpush1.msra.mxu0 0.0
    %407 = vmatprep.mubr.f32.mxu0 0.0
    %408 = vmatmul.mubr.f32.gmra.mrb[0].mxu0 %v341
    %v409 = vpop.f32.mrb[0].mxu0
    %v410 = vadd.f32 0.0, %v409
    %v411 = vpop.f32.mrb[0].mxu0
    %412 = vdwg.mxu0
    %v414 = vsel %vm339, %v331, 0
    %416 = vmatprep.subr.mxu0 0.0
    %417 = vmatpush1.msra.mxu0 %v332
    %418 = vmatprep.subr.mxu0 0.0
    %419 = vmatpush1.msra.mxu0 0.0
    %420 = vmatprep.subr.mxu0 0.0
    %421 = vmatpush1.msra.mxu0 0.0
    %422 = vmatprep.subr.mxu0 0.0
    %423 = vmatpush1.msra.mxu0 0.0
    %424 = vmatprep.subr.mxu0 0.0
    %425 = vmatpush1.msra.mxu0 0.0
    %426 = vmatprep.subr.mxu0 0.0
    %427 = vmatpush1.msra.mxu0 0.0
    %428 = vmatprep.subr.mxu0 0.0
    %429 = vmatpush1.msra.mxu0 0.0
    %430 = vmatprep.subr.mxu0 0.0
    %431 = vmatpush1.msra.mxu0 0.0
    %432 = vmatprep.subr.mxu0 0.0
    %433 = vmatpush1.msra.mxu0 0.0
    %434 = vmatprep.subr.mxu0 0.0
    %435 = vmatpush1.msra.mxu0 0.0
    %436 = vmatprep.subr.mxu0 0.0
    %437 = vmatpush1.msra.mxu0 0.0
    %438 = vmatprep.subr.mxu0 0.0
    %439 = vmatpush1.msra.mxu0 0.0
    %440 = vmatprep.subr.mxu0 0.0
    %441 = vmatpush1.msra.mxu0 0.0
    %442 = vmatprep.subr.mxu0 0.0
    %443 = vmatpush1.msra.mxu0 0.0
    %444 = vmatprep.subr.mxu0 0.0
    %445 = vmatpush1.msra.mxu0 0.0
    %446 = vmatprep.subr.mxu0 0.0
    %447 = vmatpush1.msra.mxu0 0.0
    %448 = vmatprep.subr.mxu0 0.0
    %449 = vmatpush1.msra.mxu0 0.0
    %450 = vmatprep.subr.mxu0 0.0
    %451 = vmatpush1.msra.mxu0 0.0
    %452 = vmatprep.subr.mxu0 0.0
    %453 = vmatpush1.msra.mxu0 0.0
    %454 = vmatprep.subr.mxu0 0.0
    %455 = vmatpush1.msra.mxu0 0.0
    %456 = vmatprep.subr.mxu0 0.0
    %457 = vmatpush1.msra.mxu0 0.0
    %458 = vmatprep.subr.mxu0 0.0
    %459 = vmatpush1.msra.mxu0 0.0
    %460 = vmatprep.subr.mxu0 0.0
    %461 = vmatpush1.msra.mxu0 0.0
    %462 = vmatprep.subr.mxu0 0.0
    %463 = vmatpush1.msra.mxu0 0.0
    %464 = vmatprep.subr.mxu0 0.0
    %465 = vmatpush1.msra.mxu0 0.0
    %466 = vmatprep.subr.mxu0 0.0
    %467 = vmatpush1.msra.mxu0 0.0
    %468 = vmatprep.subr.mxu0 0.0
    %469 = vmatpush1.msra.mxu0 0.0
    %470 = vmatprep.subr.mxu0 0.0
    %471 = vmatpush1.msra.mxu0 0.0
    %472 = vmatprep.subr.mxu0 0.0
    %473 = vmatpush1.msra.mxu0 0.0
    %474 = vmatprep.subr.mxu0 0.0
    %475 = vmatpush1.msra.mxu0 0.0
    %476 = vmatprep.subr.mxu0 0.0
    %477 = vmatpush1.msra.mxu0 0.0
    %478 = vmatprep.subr.mxu0 0.0
    %479 = vmatpush1.msra.mxu0 0.0
    %480 = vmatprep.mubr.f32.mxu0 0.0
    %481 = vmatmul.mubr.f32.gmra.mrb[0].mxu0 %v414
    %v482 = vpop.f32.mrb[0].mxu0
    %v483 = vadd.f32 %v410, %v482
    %v484 = vpop.f32.mrb[0].mxu0
    %485 = vdwg.mxu0
    %s486 = scalar_lea.vmem %s4, 16
    %v487 = vld [vmem:[%s486] sm:$0xff]
    %488 = vrot.lane.b32.xlu0 %v332, 126
    %v489 = vpop.permute.xlu0 %488
    %v492 = vsel %vm339, %v487, 0
    %494 = vmatprep.subr.mxu0 0.0
    %495 = vmatpush1.msra.mxu0 %v489
    %496 = vmatprep.subr.mxu0 0.0
    %497 = vmatpush1.msra.mxu0 0.0
    %498 = vmatprep.subr.mxu0 0.0
    %499 = vmatpush1.msra.mxu0 0.0
    %500 = vmatprep.subr.mxu0 0.0
    %501 = vmatpush1.msra.mxu0 0.0
    %502 = vmatprep.subr.mxu0 0.0
    %503 = vmatpush1.msra.mxu0 0.0
    %504 = vmatprep.subr.mxu0 0.0
    %505 = vmatpush1.msra.mxu0 0.0
    %506 = vmatprep.subr.mxu0 0.0
    %507 = vmatpush1.msra.mxu0 0.0
    %508 = vmatprep.subr.mxu0 0.0
    %509 = vmatpush1.msra.mxu0 0.0
    %510 = vmatprep.subr.mxu0 0.0
    %511 = vmatpush1.msra.mxu0 0.0
    %512 = vmatprep.subr.mxu0 0.0
    %513 = vmatpush1.msra.mxu0 0.0
    %514 = vmatprep.subr.mxu0 0.0
    %515 = vmatpush1.msra.mxu0 0.0
    %516 = vmatprep.subr.mxu0 0.0
    %517 = vmatpush1.msra.mxu0 0.0
    %518 = vmatprep.subr.mxu0 0.0
    %519 = vmatpush1.msra.mxu0 0.0
    %520 = vmatprep.subr.mxu0 0.0
    %521 = vmatpush1.msra.mxu0 0.0
    %522 = vmatprep.subr.mxu0 0.0
    %523 = vmatpush1.msra.mxu0 0.0
    %524 = vmatprep.subr.mxu0 0.0
    %525 = vmatpush1.msra.mxu0 0.0
    %526 = vmatprep.subr.mxu0 0.0
    %527 = vmatpush1.msra.mxu0 0.0
    %528 = vmatprep.subr.mxu0 0.0
    %529 = vmatpush1.msra.mxu0 0.0
    %530 = vmatprep.subr.mxu0 0.0
    %531 = vmatpush1.msra.mxu0 0.0
    %532 = vmatprep.subr.mxu0 0.0
    %533 = vmatpush1.msra.mxu0 0.0
    %534 = vmatprep.subr.mxu0 0.0
    %535 = vmatpush1.msra.mxu0 0.0
    %536 = vmatprep.subr.mxu0 0.0
    %537 = vmatpush1.msra.mxu0 0.0
    %538 = vmatprep.subr.mxu0 0.0
    %539 = vmatpush1.msra.mxu0 0.0
    %540 = vmatprep.subr.mxu0 0.0
    %541 = vmatpush1.msra.mxu0 0.0
    %542 = vmatprep.subr.mxu0 0.0
    %543 = vmatpush1.msra.mxu0 0.0
    %544 = vmatprep.subr.mxu0 0.0
    %545 = vmatpush1.msra.mxu0 0.0
    %546 = vmatprep.subr.mxu0 0.0
    %547 = vmatpush1.msra.mxu0 0.0
    %548 = vmatprep.subr.mxu0 0.0
    %549 = vmatpush1.msra.mxu0 0.0
    %550 = vmatprep.subr.mxu0 0.0
    %551 = vmatpush1.msra.mxu0 0.0
    %552 = vmatprep.subr.mxu0 0.0
    %553 = vmatpush1.msra.mxu0 0.0
    %554 = vmatprep.subr.mxu0 0.0
    %555 = vmatpush1.msra.mxu0 0.0
    %556 = vmatprep.subr.mxu0 0.0
    %557 = vmatpush1.msra.mxu0 0.0
    %558 = vmatprep.mubr.f32.mxu0 0.0
    %559 = vmatmul.mubr.f32.gmra.mrb[0].mxu0 %v492
    %v560 = vpop.f32.mrb[0].mxu0
    %v561 = vadd.f32 0.0, %v560
    %v562 = vpop.f32.mrb[0].mxu0
    %563 = vdwg.mxu0
    %v564 = vadd.f32 %v483, %v561
    %v565 = vmul.f32 %v564, %v53
    %v566 = vsel %vm294, %v565, 0.0
    %567 = vadd.xlane.f32.xlu0 %v566
    %v568 = vpop.xlane.xlu0 %567
    %v569 = vmul.f32 %v568, 0.03125
    %v570 = vsub.f32 %v564, %v569
    %v571 = vmul.f32 %v570, %v53
    %v572 = vmul.f32 %v571, %v571
    %v573 = vsel %vm294, %v572, 0.0
    %574 = vadd.xlane.f32.xlu0 %v573
    %v575 = vpop.xlane.xlu0 %574
    %v576 = vmul.f32 %v575, 0.03125
    %v577 = vld [vmem:[%s5] sm:$0xff]
    %v578 = vadd.f32 %v576, 1e-05
    %v579 = vrsqrt.pop %v578
    %v580 = vmul.f32 %v577, %v579
    %582 = vset.pattern.permute.xlu0 0
    %583 = vperm.xlu0 %582, %v580
    %v584 = vpop.permute.xlu0 %583
    %v586 = vmul.f32 %v570, %v584
    %v587 = vld [vmem:[%s6] sm:$0xff]
    %589 = vset.pattern.permute.xlu0 0
    %590 = vperm.xlu0 %589, %v587
    %v591 = vpop.permute.xlu0 %590
    %v593 = vadd.f32 %v586, %v591
    %v594 = vmax.f32 %v593, 0.0
    %v595 = vmul.f32 %v594, %v53
    %597 = vrot.lane.b32.xlu0 %v595, 1
    %v598 = vpop.permute.xlu0 %597
    %600 = vst.msk [vmem:[#allocation2] sm:$0xff] %vm329, %v598
    %v601 = vld [vmem:[#allocation2] sm:$0xff]
    %603 = vrot.lane.b32.xlu0 %v601, 126
    %v604 = vpop.permute.xlu0 %603
    %vm606 = vcmask 130048
    %607 = vst.msk [vmem:[#allocation3] sm:$0xff] %vm606, %v604
    %v608 = vld [vmem:[#allocation2] sm:$0xff]
    %610 = vrot.lane.b32.xlu0 %v608, 108
    %v611 = vpop.permute.xlu0 %610
    %s613 = scalar_lea.vmem [#allocation3], 8
    %614 = vst.msk [vmem:[%s613] sm:$0xff] %vm606, %v611
    // Predicated region
    $region30: #{conv_layers_forward.1} parent=1 // pred_check
      _
    $region31: #{conv_layers_forward.1} parent=1 // pred_check_branch
      %616 = sbr.rel (0) target = $region33
    $region32: #{conv_layers_forward.1} parent=1 // pred_region
      %s618 = ssub.s32 256, 256
      %619 = vsyncadd [#allocation4], %s618
      %s620 = sshll.u32 [#allocation3], 4
      %s621 = int_to_ptr.vmem [resolvable:$true] %s620
      %626 = dma.vmem_to_hbm [thread:$0]  %s621, 256, %s7, [#allocation4], 128, 128, 8
    $region33: #{conv_layers_forward.1} parent=1 // pred_fallthru
      _
    // Predicated region
    $region34: #{conv_layers_forward.1} parent=1 // pred_check
      _
    $region35: #{conv_layers_forward.1} parent=1 // pred_check_branch
      %628 = sbr.rel (0) target = $region37
    $region36: #{conv_layers_forward.1} parent=1 // pred_region
      %629 = dma.done [#allocation4], 256
    $region37: #{conv_layers_forward.1} parent=1 // pred_fallthru
      _
    %630 = vsyncpa [#allocation4], 1

</llo_original>
